<compile_context>
chip_gen: v7x
topology: tpu7x:2x2x1
jax: 0.10.0
libtpu: 0.0.40
codegen_flags: <defaults>
</compile_context>

<pallas_src>
import functools

import numpy as np
import jax
import jax.numpy as jnp
from jax import lax
from jax.experimental import pallas as pl
from jax.experimental.pallas import tpu as pltpu


# ----------------------------- host-side helpers ------------------------------

def _round_up(x: int, m: int) -> int:
    return ((x + m - 1) // m) * m


def hann_window(n: int) -> np.ndarray:
    k = np.arange(n)
    return (0.5 - 0.5 * np.cos(2.0 * np.pi * k / n)).astype(np.float32)


def fused_dft_basis(window_length: int, num_fft: int, n_freq_pad: int) -> np.ndarray:
    """Fused real/imag DFT basis with the analysis window folded in.

    Returns (W, 2*n_freq_pad): columns [0:F) are cos terms, [n_freq_pad:n_freq_pad+F)
    are (negated) sin terms; the rest is zero padding for lane density.
    """
    win = hann_window(window_length)
    n_bins = num_fft // 2 + 1
    t = np.arange(window_length)[:, None]
    f = np.arange(n_bins)[None, :]
    ang = 2.0 * np.pi * t * f / num_fft
    cos_w = (win[:, None] * np.cos(ang)).astype(np.float32)
    sin_w = (-(win[:, None]) * np.sin(ang)).astype(np.float32)
    basis = np.zeros((window_length, 2 * n_freq_pad), dtype=np.float32)
    basis[:, :n_bins] = cos_w
    basis[:, n_freq_pad:n_freq_pad + n_bins] = sin_w
    return basis


def mel_filterbank_padded(num_filters: int, num_fft: int, fs: float,
                          f_min: float, f_max: float,
                          n_freq_pad: int, n_mel_pad: int) -> np.ndarray:
    """HTK-style triangular mel filterbank, zero-padded to (n_freq_pad, n_mel_pad)."""
    def hz_to_mel(f):
        return 2595.0 * np.log10(1.0 + f / 700.0)

    def mel_to_hz(m):
        return 700.0 * (10.0 ** (m / 2595.0) - 1.0)

    n_bins = num_fft // 2 + 1
    mel_pts = np.linspace(hz_to_mel(f_min), hz_to_mel(f_max), num_filters + 2)
    hz_pts = mel_to_hz(mel_pts)
    bin_freqs = np.arange(n_bins) * fs / num_fft

    fb = np.zeros((n_freq_pad, n_mel_pad), dtype=np.float32)
    for m in range(num_filters):
        lo, ctr, hi = hz_pts[m], hz_pts[m + 1], hz_pts[m + 2]
        up = (bin_freqs - lo) / max(ctr - lo, 1e-10)
        down = (hi - bin_freqs) / max(hi - ctr, 1e-10)
        fb[:n_bins, m] = np.maximum(0.0, np.minimum(up, down))
    return fb


def make_freq_mask(key, batch_size: int, num_filters: int,
                   freq_mask_param: int) -> jnp.ndarray:
    """Per-example frequency masks (1.0 = keep, 0.0 = masked), torchaudio-style."""
    k1, k2 = jax.random.split(key)
    value = jax.random.uniform(k1, (batch_size,)) * freq_mask_param
    min_value = jax.random.uniform(k2, (batch_size,)) * (num_filters - value)
    start = jnp.floor(min_value)[:, None]
    end = jnp.floor(min_value + value)[:, None]
    idx = jnp.arange(num_filters)[None, :].astype(jnp.float32)
    masked = (idx >= start) & (idx < end)
    return jnp.where(masked, 0.0, 1.0).astype(jnp.float32)


# --------------------------------- kernel -------------------------------------

def frontend_kernel(frames_ref, basis_ref, fb_ref, mask_ref, o_ref, *,
                    n_freq_pad: int, power_threshold: float):
    # frames_ref: (1, tile_t, W) bf16      basis_ref: (W, 2*Fp) bf16
    # fb_ref:     (Fp, Mp) bf16            mask_ref:  (1, 8, Mp) f32 (rows identical)
    # o_ref:      (1, tile_t, Mp) f32
    x = frames_ref[0]                                                   # (tile_t, W)

    # fused windowed DFT: one MXU matmul -> [re | im]
    y = jnp.dot(x, basis_ref[...], preferred_element_type=jnp.float32)  # (tile_t, 2*Fp)
    re = y[:, :n_freq_pad]
    im = y[:, n_freq_pad:]
    power = re * re + im * im                                           # f32 (tile_t, Fp)

    # mel filterbank matmul (bf16 in, f32 acc) + clipped log power
    mel = jnp.dot(power.astype(fb_ref.dtype), fb_ref[...],
                  preferred_element_type=jnp.float32)                   # (tile_t, Mp)
    logmel = jnp.log(jnp.maximum(mel, power_threshold))

    # frequency mask (0/1, also zeroes the padded filter lanes) — plain multiply
    m = mask_ref[...][0, :1, :]                                         # (1, Mp)
    o_ref[...] = (logmel * m)[None, :, :]                               # lane-dense store


# -------------------------------- wrapper --------------------------------------

def frontend_forward(waveform: jnp.ndarray, *,
                     fs: float = 16000.0,
                     num_filters: int = 32,
                     window_length: int = 64,
                     shift_length: int = 16,
                     num_fft: int = 64,
                     f_min: float = 0.0,
                     f_max: float | None = None,
                     power_threshold: float = 1e-6,
                     freq_mask_param: int = 26,
                     batch_norm_eps: float = 1e-5,
                     mask_key=None,
                     frame_tile: int = 512) -> jnp.ndarray:
    """waveform: (B, 1, time) float32 -> (B, 1, num_filters, num_frames)."""
    if f_max is None:
        f_max = fs / 2.0
    B, _, time = waveform.shape
    W = window_length
    T = (time - W) // shift_length + 1
    n_bins = num_fft // 2 + 1
    Fp = _round_up(max(n_bins, 128), 128)      # padded frequency bins
    Mp = _round_up(max(num_filters, 128), 128)  # padded mel filters

    # --- framing (wrapper); cast matmul input to bf16 -------------------------
    wav = waveform[:, 0, :]
    idx = jnp.arange(T)[:, None] * shift_length + jnp.arange(W)[None, :]
    frames = wav[:, idx].astype(jnp.bfloat16)                  # (B, T, W)

    # --- frame tiling over a (B, num_tiles) grid -------------------------------
    tile_t = min(frame_tile, _round_up(T, 8))
    T_pad = _round_up(T, tile_t)
    if T_pad != T:
        frames = jnp.pad(frames, ((0, 0), (0, T_pad - T), (0, 0)))
    nt = T_pad // tile_t

    # --- deterministic "parameters" (padded, bf16 matmul operands) -------------
    basis = jnp.asarray(fused_dft_basis(W, num_fft, Fp), dtype=jnp.bfloat16)
    fb = jnp.asarray(
        mel_filterbank_padded(num_filters, num_fft, fs, f_min, f_max, Fp, Mp),
        dtype=jnp.bfloat16)

    if mask_key is None:
        mask_key = jax.random.PRNGKey(0)
    freq_mask = make_freq_mask(mask_key, B, num_filters, freq_mask_param)  # (B, M)
    mask_pad = jnp.zeros((B, Mp), jnp.float32).at[:, :num_filters].set(freq_mask)
    mask_pad = jnp.broadcast_to(mask_pad[:, None, :], (B, 8, Mp))          # (B, 8, Mp)

    kernel = functools.partial(frontend_kernel,
                               n_freq_pad=Fp,
                               power_threshold=power_threshold)

    flops = (2 * B * T_pad * W * (2 * Fp)        # fused DFT matmul
             + 2 * B * T_pad * Fp * Mp           # mel filterbank matmul
             + 5 * B * T_pad * Fp                # power + elementwise
             + 3 * B * T_pad * Mp)               # clip/mask
    bytes_accessed = (B * T_pad * W * 2          # frames (bf16)
                      + W * 2 * Fp * 2 + Fp * Mp * 2 + B * 8 * Mp * 4
                      + B * T_pad * Mp * 4)      # output (f32)
    cost = pl.CostEstimate(flops=int(flops),
                           transcendentals=int(B * T_pad * Mp),
                           bytes_accessed=int(bytes_accessed))

    out = pl.pallas_call(
        kernel,
        out_shape=jax.ShapeDtypeStruct((B, T_pad, Mp), jnp.float32),
        grid=(B, nt),
        in_specs=[
            pl.BlockSpec((1, tile_t, W), lambda b, t: (b, t, 0)),   # frames tile
            pl.BlockSpec((W, 2 * Fp), lambda b, t: (0, 0)),         # fused DFT basis
            pl.BlockSpec((Fp, Mp), lambda b, t: (0, 0)),            # mel filterbank
            pl.BlockSpec((1, 8, Mp), lambda b, t: (b, 0, 0)),       # per-example mask
        ],
        out_specs=pl.BlockSpec((1, tile_t, Mp), lambda b, t: (b, t, 0)),
        compiler_params=pltpu.CompilerParams(
            dimension_semantics=("parallel", "parallel"),
            vmem_limit_bytes=32 * 1024 * 1024),
        cost_estimate=cost,
    )(frames, basis, fb, mask_pad)

    # --- BatchNorm2d (training-mode batch stats, gamma=1, beta=0) in wrapper ---
    # Masked zeros are included in the statistics, matching mask-before-BN order.
    logmel_masked = out[:, :T, :num_filters]                     # (B, T, M) f32
    mean = jnp.mean(logmel_masked)
    var = jnp.mean(jnp.square(logmel_masked - mean))
    norm = (logmel_masked - mean) * lax.rsqrt(var + batch_norm_eps)

    # (B, T, M) -> (B, num_features=1, M, T)
    return jnp.transpose(norm, (0, 2, 1))[:, None, :, :]


# --------------------------------- driver --------------------------------------

if __name__ == "__main__":
    key = jax.random.PRNGKey(0)
    k_wav, k_mask = jax.random.split(key)

    B = 2
    window_length, shift_length = 64, 16
    num_frames_target = 16
    time = window_length + shift_length * (num_frames_target - 1)   # 304 samples

    waveform = jax.random.normal(k_wav, (B, 1, time), dtype=jnp.float32)

    tfr = frontend_forward(
        waveform,
        fs=16000.0,
        num_filters=32,
        window_length=window_length,
        shift_length=shift_length,
        num_fft=64,
        power_threshold=1e-6,
        freq_mask_param=26,
        batch_norm_eps=1e-5,
        mask_key=k_mask,
    )
    tfr = jax.block_until_ready(tfr)

    assert tfr.shape == (B, 1, 32, num_frames_target), tfr.shape
    assert bool(jnp.all(jnp.isfinite(tfr)))
    print("KERNEL_OK")
</pallas_src>

<mosaic_0001>
module attributes {stable_mosaic.version = 11 : i64} {
  func.func @frontend_kernel(%arg0: i32, %arg1: i32, %arg2: memref<1x16x64xbf16, #tpu.memory_space<vmem>>, %arg3: memref<64x256xbf16, #tpu.memory_space<vmem>>, %arg4: memref<128x128xbf16, #tpu.memory_space<vmem>>, %arg5: memref<1x8x128xf32, #tpu.memory_space<vmem>>, %arg6: memref<1x16x128xf32, #tpu.memory_space<vmem>>) attributes {dimension_semantics = [#tpu.dimension_semantics<parallel>, #tpu.dimension_semantics<parallel>], iteration_bounds = array<i64: 2, 1>, scalar_prefetch = 0 : i64, scratch_operands = 0 : i64, tpu.core_type = #tpu.core_type<tc>, window_params = [{transform_indices = @transform_0, window_bounds = array<i64: 1, 16, 64>}, {pipeline_mode = #tpu.pipeline_mode<synchronous>, transform_indices = @transform_1, window_bounds = array<i64: 64, 256>}, {pipeline_mode = #tpu.pipeline_mode<synchronous>, transform_indices = @transform_2, window_bounds = array<i64: 128, 128>}, {transform_indices = @transform_3, window_bounds = array<i64: 1, 8, 128>}, {transform_indices = @transform_4, window_bounds = array<i64: 1, 16, 128>}]} {
    %c0 = arith.constant 0 : index
    %c0_0 = arith.constant 0 : index
    %c0_1 = arith.constant 0 : index
    %0 = vector.load %arg2[%c0, %c0_0, %c0_1] : memref<1x16x64xbf16, #tpu.memory_space<vmem>>, vector<1x16x64xbf16>
    %1 = vector.shape_cast %0 : vector<1x16x64xbf16> to vector<16x64xbf16>
    %c0_2 = arith.constant 0 : index
    %c0_3 = arith.constant 0 : index
    %2 = vector.load %arg3[%c0_2, %c0_3] : memref<64x256xbf16, #tpu.memory_space<vmem>>, vector<64x256xbf16>
    %cst = arith.constant dense<0.000000e+00> : vector<16x256xf32>
    %3 = tpu.matmul %1, %2, %cst {dimension_numbers = #tpu.dot_dimension_numbers<[1], [0], [0], [1], [0, 0, 1, 1], [], []>} : vector<16x64xbf16>, vector<64x256xbf16>, vector<16x256xf32> -> vector<16x256xf32>
    %4 = vector.extract_strided_slice %3 {offsets = [0, 0], sizes = [16, 128], strides = [1, 1]} : vector<16x256xf32> to vector<16x128xf32>
    %5 = vector.extract_strided_slice %3 {offsets = [0, 128], sizes = [16, 128], strides = [1, 1]} : vector<16x256xf32> to vector<16x128xf32>
    %6 = arith.mulf %4, %4 : vector<16x128xf32>
    %7 = arith.mulf %5, %5 : vector<16x128xf32>
    %8 = arith.addf %6, %7 : vector<16x128xf32>
    %9 = arith.truncf %8 : vector<16x128xf32> to vector<16x128xbf16>
    %c0_4 = arith.constant 0 : index
    %c0_5 = arith.constant 0 : index
    %10 = vector.load %arg4[%c0_4, %c0_5] : memref<128x128xbf16, #tpu.memory_space<vmem>>, vector<128x128xbf16>
    %cst_6 = arith.constant dense<0.000000e+00> : vector<16x128xf32>
    %11 = tpu.matmul %9, %10, %cst_6 {dimension_numbers = #tpu.dot_dimension_numbers<[1], [0], [0], [1], [0, 0, 1, 1], [], []>} : vector<16x128xbf16>, vector<128x128xbf16>, vector<16x128xf32> -> vector<16x128xf32>
    %cst_7 = arith.constant 9.99999997E-7 : f32
    %12 = vector.broadcast %cst_7 : f32 to vector<16x128xf32>
    %13 = arith.maximumf %11, %12 : vector<16x128xf32>
    %14 = math.log %13 : vector<16x128xf32>
    %c0_8 = arith.constant 0 : index
    %c0_9 = arith.constant 0 : index
    %c0_10 = arith.constant 0 : index
    %15 = vector.load %arg5[%c0_8, %c0_9, %c0_10] : memref<1x8x128xf32, #tpu.memory_space<vmem>>, vector<1x8x128xf32>
    %16 = vector.extract_strided_slice %15 {offsets = [0, 0, 0], sizes = [1, 1, 128], strides = [1, 1, 1]} : vector<1x8x128xf32> to vector<1x1x128xf32>
    %17 = vector.shape_cast %16 : vector<1x1x128xf32> to vector<1x128xf32>
    %18 = vector.broadcast %17 : vector<1x128xf32> to vector<16x128xf32>
    %19 = arith.mulf %14, %18 : vector<16x128xf32>
    %20 = vector.shape_cast %19 : vector<16x128xf32> to vector<1x16x128xf32>
    %c0_11 = arith.constant 0 : index
    %c0_12 = arith.constant 0 : index
    %c0_13 = arith.constant 0 : index
    %21 = vector.load %arg6[%c0_11, %c0_12, %c0_13] : memref<1x16x128xf32, #tpu.memory_space<vmem>>, vector<1x16x128xf32>
    tpu.vector_store %arg6[%c0_11, %c0_12, %c0_13], %20 {strides = array<i32>} : memref<1x16x128xf32, #tpu.memory_space<vmem>>, vector<1x16x128xf32>,
    return
  }
  func.func @transform_0(%arg0: i32, %arg1: i32) -> (i32, i32, i32) {
    %c0_i32 = arith.constant 0 : i32
    %c0_i32_0 = arith.constant 0 : i32
    return %arg0, %arg1, %c0_i32 : i32, i32, i32
  }
  func.func @transform_1(%arg0: i32, %arg1: i32) -> (i32, i32) {
    %c0_i32 = arith.constant 0 : i32
    %c0_i32_0 = arith.constant 0 : i32
    %c0_i32_1 = arith.constant 0 : i32
    return %c0_i32, %c0_i32_0 : i32, i32
  }
  func.func @transform_2(%arg0: i32, %arg1: i32) -> (i32, i32) {
    %c0_i32 = arith.constant 0 : i32
    %c0_i32_0 = arith.constant 0 : i32
    %c0_i32_1 = arith.constant 0 : i32
    return %c0_i32, %c0_i32_0 : i32, i32
  }
  func.func @transform_3(%arg0: i32, %arg1: i32) -> (i32, i32, i32) {
    %c0_i32 = arith.constant 0 : i32
    %c0_i32_0 = arith.constant 0 : i32
    %c0_i32_1 = arith.constant 0 : i32
    return %arg0, %c0_i32, %c0_i32_0 : i32, i32, i32
  }
  func.func @transform_4(%arg0: i32, %arg1: i32) -> (i32, i32, i32) {
    %c0_i32 = arith.constant 0 : i32
    %c0_i32_0 = arith.constant 0 : i32
    return %arg0, %arg1, %c0_i32 : i32, i32, i32
  }
}

</mosaic_0001>

<llo_original>
// kernel: tpu_custom_call.1
$region0: #{tpu_custom_call.1}
  #allocation0 [shape = 'u32[]', space=smem, size = 0x4, offset = 0x4, fixed_abs, tag = 'smem constant byte address 0x4 - core index']
  #allocation1 [shape = 'u32[144,128]{1,0:T(1,128)}', space=vmem, size = 0x12000, scoped, tag = 'internal scratch']
  %s0 = inlined_call_operand.hbm [shape: bf16[2,16,64], index: 0, kind: input, shape index: {}]
  %s1 = inlined_call_operand.hbm [shape: bf16[64,256], index: 1, kind: input, shape index: {}]
  %s2 = inlined_call_operand.hbm [shape: bf16[128,128], index: 2, kind: input, shape index: {}]
  %s3 = inlined_call_operand.hbm [shape: f32[2,8,128], index: 3, kind: input, shape index: {}]
  %s4 = inlined_call_operand.hbm [shape: f32[2,16,128], index: 4, kind: output, shape index: {}]
  %s5 = sld [smem:[#allocation0]]
  $region65: #{tpu_custom_call.1} parent=0
    _
  %s7 = ssub.s32 1, %s5
  %s8 = scalar_select 0, %s7, %s5
  $region1: #{tpu_custom_call.1} parent=0
    #allocation2 [shape = 'u8[8192]{0}', space=vmem, size = 0x2000, scoped, tag = 'input window, operand 0']
    #allocation3 [shape = 's32[2]{0}', space=sflag, size = 0x8, scoped, tag = 'scoped memory for tpu_custom_call.1']
    #allocation4 [shape = 's32[2]{0}', space=sflag, size = 0x8, scoped, tag = 'scoped memory for tpu_custom_call.1']
    #allocation5 [shape = 'u8[32768]{0}', space=vmem, size = 0x8000, scoped, tag = 'input window, operand 1, single buffered']
    #allocation6 [shape = 's32[1]{0}', space=sflag, size = 0x4, scoped, tag = 'scoped memory for tpu_custom_call.1']
    #allocation7 [shape = 'u8[32768]{0}', space=vmem, size = 0x8000, scoped, tag = 'input window, operand 2, single buffered']
    #allocation8 [shape = 'u8[8192]{0}', space=vmem, size = 0x2000, scoped, tag = 'input window, operand 3']
    #allocation9 [shape = 's32[2]{0}', space=sflag, size = 0x8, scoped, tag = 'scoped memory for tpu_custom_call.1']
    #allocation10 [shape = 'u8[16384]{0}', space=vmem, size = 0x4000, scoped, tag = 'output window, operand 0']
    %9 = vsyncpa [#allocation3], 0
    %s10 = scalar_lea.sflag [#allocation3], 1
    %11 = vsyncpa %s10, 0
    %12 = vsyncpa [#allocation6], 0
    %13 = vsyncpa [#allocation9], 0
    %s14 = scalar_lea.sflag [#allocation9], 1
    %15 = vsyncpa %s14, 0
    %16 = vsyncpa [#allocation4], 0
    %s17 = scalar_lea.sflag [#allocation4], 1
    %18 = vsyncpa %s17, 0
    loop: start=0, step=1, limit=4
    $region2: #{tpu_custom_call.1} parent=1 // loop_pre_header
      _
    $region3: #{tpu_custom_call.1} parent=1 // loop_header
      %s20 = sphi 0, %s24
      %p21 = scmp.ge.s32.totalorder %s20, 4
      %s27 = sphi 0, %s39
      %s28 = sphi 0, %s35
      %s29 = sphi 0, %s27
      %s30 = sphi 0, %s28
      %s31 = sphi 0, %s29
      %s32 = sphi 0, %s30
      %s44 = sphi 0, %s46
      %s47 = sphi 0, %s44
      %s48 = sphi 0, %s47
      %s64 = sphi 0, %s48
      %s68 = sphi 0, %s68
      %s70 = sphi 0, %s68
      %s71 = sphi 0, %s70
      %s85 = sphi 0, %s71
      %s89 = sphi 0, %s89
      %s91 = sphi 0, %s89
      %s92 = sphi 0, %s91
      %s106 = sphi 0, %s92
      %s112 = sphi 0, %s114
      %s115 = sphi 0, %s112
      %s116 = sphi 0, %s115
      %s132 = sphi 0, %s116
      %s140 = sphi 0, %s142
      %s143 = sphi 0, %s140
      %s144 = sphi 0, %s143
      %s160 = sphi 0, %s144
    $region4: #{tpu_custom_call.1} parent=1 // loop_header_branch
      %23 = sbr.rel (%p21) target = $region8
    $region5: #{tpu_custom_call.1} parent=1 // loop_body
      %s25 = ssub.s32 %s20, 1
      %s26 = ssub.s32 %s20, 2
      %s33 = sadd.s32 1, %s28
      %p34 = scmp.ge.s32.totalorder %s33, 1
      %s35 = scalar_select %p34, 0, %s33
      %s36 = sadd.s32 1, %s27
      %s37 = scalar_select %p34, %s36, %s27
      %p38 = scmp.ge.s32.totalorder %s37, 2
      %s39 = scalar_select %p38, 0, %s37
      %s40 = ssub.s32 %s27, %s39
      %s41 = ssub.s32 %s28, %s35
      %s42 = sor.u32 %s40, %s41
      %p43 = scmp.eq.s32.totalorder %s42, 0
      %s45 = sadd.s32 %s44, 1
      %s46 = scalar_select %p43, %s44, %s45
      %p49 = pneg %p43
      %p50 = scmp.eq.s32.totalorder %s20, 1
      %p51 = por %p49, %p50
      %p52 = scmp.ne.s32.totalorder %s44, %s47
      %p53 = scmp.eq.s32.totalorder %s20, 0
      %p54 = por %p52, %p53
      %p55 = scmp.ne.s32.totalorder %s44, %s47
      %p56 = scmp.eq.s32.totalorder %s25, 1
      %p57 = por %p55, %p56
      %p58 = scmp.ne.s32.totalorder %s47, %s48
      %p59 = scmp.eq.s32.totalorder %s25, 0
      %p60 = por %p58, %p59
      %p61 = scmp.ne.s32.totalorder %s47, %s48
      %p62 = scmp.eq.s32.totalorder %s26, 1
      %p63 = por %p61, %p62
      %p65 = scmp.ne.s32.totalorder %s48, %s64
      %p66 = scmp.eq.s32.totalorder %s26, 0
      %p67 = por %p65, %p66
      %s69 = sadd.s32 %s68, 1
      %p72 = scmp.eq.s32.totalorder %s20, 1
      %p73 = scmp.ne.s32.totalorder %s68, %s70
      %p74 = scmp.eq.s32.totalorder %s20, 0
      %p75 = por %p73, %p74
      %p76 = scmp.ne.s32.totalorder %s68, %s70
      %p77 = scmp.eq.s32.totalorder %s25, 1
      %p78 = por %p76, %p77
      %p79 = scmp.ne.s32.totalorder %s70, %s71
      %p80 = scmp.eq.s32.totalorder %s25, 0
      %p81 = por %p79, %p80
      %p82 = scmp.ne.s32.totalorder %s70, %s71
      %p83 = scmp.eq.s32.totalorder %s26, 1
      %p84 = por %p82, %p83
      %p86 = scmp.ne.s32.totalorder %s71, %s85
      %p87 = scmp.eq.s32.totalorder %s26, 0
      %p88 = por %p86, %p87
      %s90 = sadd.s32 %s89, 1
      %p93 = scmp.eq.s32.totalorder %s20, 1
      %p94 = scmp.ne.s32.totalorder %s89, %s91
      %p95 = scmp.eq.s32.totalorder %s20, 0
      %p96 = por %p94, %p95
      %p97 = scmp.ne.s32.totalorder %s89, %s91
      %p98 = scmp.eq.s32.totalorder %s25, 1
      %p99 = por %p97, %p98
      %p100 = scmp.ne.s32.totalorder %s91, %s92
      %p101 = scmp.eq.s32.totalorder %s25, 0
      %p102 = por %p100, %p101
      %p103 = scmp.ne.s32.totalorder %s91, %s92
      %p104 = scmp.eq.s32.totalorder %s26, 1
      %p105 = por %p103, %p104
      %p107 = scmp.ne.s32.totalorder %s92, %s106
      %p108 = scmp.eq.s32.totalorder %s26, 0
      %p109 = por %p107, %p108
      %s110 = ssub.s32 %s27, %s39
      %p111 = scmp.eq.s32.totalorder %s110, 0
      %s113 = sadd.s32 %s112, 1
      %s114 = scalar_select %p111, %s112, %s113
      %p117 = pneg %p111
      %p118 = scmp.eq.s32.totalorder %s20, 1
      %p119 = por %p117, %p118
      %p120 = scmp.ne.s32.totalorder %s112, %s115
      %p121 = scmp.eq.s32.totalorder %s20, 0
      %p122 = por %p120, %p121
      %p123 = scmp.ne.s32.totalorder %s112, %s115
      %p124 = scmp.eq.s32.totalorder %s25, 1
      %p125 = por %p123, %p124
      %p126 = scmp.ne.s32.totalorder %s115, %s116
      %p127 = scmp.eq.s32.totalorder %s25, 0
      %p128 = por %p126, %p127
      %p129 = scmp.ne.s32.totalorder %s115, %s116
      %p130 = scmp.eq.s32.totalorder %s26, 1
      %p131 = por %p129, %p130
      %p133 = scmp.ne.s32.totalorder %s116, %s132
      %p134 = scmp.eq.s32.totalorder %s26, 0
      %p135 = por %p133, %p134
      %s136 = ssub.s32 %s27, %s39
      %s137 = ssub.s32 %s28, %s35
      %s138 = sor.u32 %s136, %s137
      %p139 = scmp.eq.s32.totalorder %s138, 0
      %s141 = sadd.s32 %s140, 1
      %s142 = scalar_select %p139, %s140, %s141
      %p145 = pneg %p139
      %p146 = scmp.eq.s32.totalorder %s20, 1
      %p147 = por %p145, %p146
      %p148 = scmp.ne.s32.totalorder %s140, %s143
      %p149 = scmp.eq.s32.totalorder %s20, 0
      %p150 = por %p148, %p149
      %p151 = scmp.ne.s32.totalorder %s140, %s143
      %p152 = scmp.eq.s32.totalorder %s25, 1
      %p153 = por %p151, %p152
      %p154 = scmp.ne.s32.totalorder %s143, %s144
      %p155 = scmp.eq.s32.totalorder %s25, 0
      %p156 = por %p154, %p155
      %p157 = scmp.ne.s32.totalorder %s143, %s144
      %p158 = scmp.eq.s32.totalorder %s26, 1
      %p159 = por %p157, %p158
      %p161 = scmp.ne.s32.totalorder %s144, %s160
      %p162 = scmp.eq.s32.totalorder %s26, 0
      %p163 = por %p161, %p162
      %p164 = scmp.le.s32.totalorder 1, %s20
      %p165 = scmp.lt.s32.totalorder %s20, 3
      %p166 = pnand %p164, %p165
      %p167 = pneg %p166
      // Predicated region
      $region9: #{tpu_custom_call.1} parent=5 // pred_check
        _
      $region10: #{tpu_custom_call.1} parent=5 // pred_check_branch
        %169 = sbr.rel (%p166) target = $region12
      $region11: #{tpu_custom_call.1} parent=5 // pred_region
        %s170 = ssub.s32 %s20, 1
        // Predicated region
        $region13: #{tpu_custom_call.1} parent=11 // pred_check
          %p171 = pneg %p81
        $region14: #{tpu_custom_call.1} parent=11 // pred_check_branch
          %173 = sbr.rel (%p171) target = $region16
        $region15: #{tpu_custom_call.1} parent=11 // pred_region
          %s175 = ssub.s32 1024, 1024
          %176 = vsyncadd [#allocation6], %s175
          %s177 = sshll.u32 [#allocation5], 4
          %s178 = int_to_ptr.vmem [resolvable:$true] %s177
          %183 = dma.hbm_to_vmem [thread:$0]  %s1, 1024, %s178, [#allocation6], 128, 128, 8
        $region16: #{tpu_custom_call.1} parent=11 // pred_fallthru
          _
        // Predicated region
        $region17: #{tpu_custom_call.1} parent=11 // pred_check
          %p184 = pneg %p102
        $region18: #{tpu_custom_call.1} parent=11 // pred_check_branch
          %186 = sbr.rel (%p184) target = $region20
        $region19: #{tpu_custom_call.1} parent=11 // pred_region
          %s188 = ssub.s32 1024, 1024
          %189 = vsyncadd [#allocation6], %s188
          %s190 = sshll.u32 [#allocation7], 4
          %s191 = int_to_ptr.vmem [resolvable:$true] %s190
          %196 = dma.hbm_to_vmem [thread:$0]  %s2, 1024, %s191, [#allocation6], 64, 64, 4
        $region20: #{tpu_custom_call.1} parent=11 // pred_fallthru
          _
      $region12: #{tpu_custom_call.1} parent=5 // pred_fallthru
        _
      %p197 = scmp.lt.s32.totalorder %s20, 2
      // Predicated region
      $region21: #{tpu_custom_call.1} parent=5 // pred_check
        %p198 = pneg %p197
      $region22: #{tpu_custom_call.1} parent=5 // pred_check_branch
        %200 = sbr.rel (%p198) target = $region24
      $region23: #{tpu_custom_call.1} parent=5 // pred_region
        // Predicated region
        $region25: #{tpu_custom_call.1} parent=23 // pred_check
          %p201 = pneg %p54
        $region26: #{tpu_custom_call.1} parent=23 // pred_check_branch
          %203 = sbr.rel (%p201) target = $region28
        $region27: #{tpu_custom_call.1} parent=23 // pred_region
          %s204 = sand.u32 %s44, 1
          %s205 = scalar_lea.sflag [#allocation3], %s204
          %s206 = sand.u32 %s44, 1
          %s207 = smul.addr %s206, 8
          %s208 = scalar_lea.vmem [#allocation2], %s207
          %s209 = smul.u32 2, %s28
          %s211 = ssub.s32 128, 128
          %212 = vsyncadd %s205, %s211
          %s213 = smul.addr %s27, 2
          %s214 = sadd.s32 %s209, %s213
          %s215 = smul.addr %s214, 64
          %s216 = scalar_lea.hbm %s0, %s215
          %s217 = sshll.u32 %s208, 4
          %s218 = int_to_ptr.vmem [resolvable:$true] %s217
          %223 = dma.hbm_to_vmem [thread:$0]  %s216, 128, %s218, %s205, 64, 64, 4
        $region28: #{tpu_custom_call.1} parent=23 // pred_fallthru
          _
        // Predicated region
        $region29: #{tpu_custom_call.1} parent=23 // pred_check
          %p224 = pneg %p122
        $region30: #{tpu_custom_call.1} parent=23 // pred_check_branch
          %226 = sbr.rel (%p224) target = $region32
        $region31: #{tpu_custom_call.1} parent=23 // pred_region
          %s227 = sand.u32 %s112, 1
          %s228 = scalar_lea.sflag [#allocation9], %s227
          %s229 = sand.u32 %s112, 1
          %s230 = smul.addr %s229, 8
          %s231 = scalar_lea.vmem [#allocation8], %s230
          %s233 = ssub.s32 128, 128
          %234 = vsyncadd %s228, %s233
          %s235 = smul.addr %s27, 128
          %s236 = scalar_lea.hbm %s3, %s235
          %s238 = sshll.u32 %s231, 4
          %s239 = int_to_ptr.vmem [resolvable:$true] %s238
          %241 = dma.hbm_to_vmem [thread:$0]  %s236, 128, %s239, %s228
        $region32: #{tpu_custom_call.1} parent=23 // pred_fallthru
          _
      $region24: #{tpu_custom_call.1} parent=5 // pred_fallthru
        _
      %p242 = scmp.le.s32.totalorder 1, %s20
      %p243 = scmp.lt.s32.totalorder %s20, 3
      %p244 = pnand %p242, %p243
      %p245 = pneg %p244
      // Predicated region
      $region33: #{tpu_custom_call.1} parent=5 // pred_check
        _
      $region34: #{tpu_custom_call.1} parent=5 // pred_check_branch
        %247 = sbr.rel (%p244) target = $region36
      $region35: #{tpu_custom_call.1} parent=5 // pred_region
        %s248 = ssub.s32 %s20, 1
        %s249 = sand.u32 %s47, 1
        %s250 = scalar_lea.sflag [#allocation3], %s249
        %s251 = sand.u32 %s47, 1
        %s252 = smul.addr %s251, 8
        %s253 = scalar_lea.vmem [#allocation2], %s252
        // Predicated region
        $region37: #{tpu_custom_call.1} parent=35 // pred_check
          %p254 = pneg %p60
        $region38: #{tpu_custom_call.1} parent=35 // pred_check_branch
          %256 = sbr.rel (%p254) target = $region40
        $region39: #{tpu_custom_call.1} parent=35 // pred_region
          %257 = dma.done %s250, 128
        $region40: #{tpu_custom_call.1} parent=35 // pred_fallthru
          _
        // Predicated region
        $region41: #{tpu_custom_call.1} parent=35 // pred_check
          %p258 = pneg %p81
        $region42: #{tpu_custom_call.1} parent=35 // pred_check_branch
          %260 = sbr.rel (%p258) target = $region44
        $region43: #{tpu_custom_call.1} parent=35 // pred_region
          %261 = dma.done [#allocation6], 1024
        $region44: #{tpu_custom_call.1} parent=35 // pred_fallthru
          _
        // Predicated region
        $region45: #{tpu_custom_call.1} parent=35 // pred_check
          %p262 = pneg %p102
        $region46: #{tpu_custom_call.1} parent=35 // pred_check_branch
          %264 = sbr.rel (%p262) target = $region48
        $region47: #{tpu_custom_call.1} parent=35 // pred_region
          %265 = dma.done [#allocation6], 1024
        $region48: #{tpu_custom_call.1} parent=35 // pred_fallthru
          _
        %s266 = sand.u32 %s115, 1
        %s267 = scalar_lea.sflag [#allocation9], %s266
        %s268 = sand.u32 %s115, 1
        %s269 = smul.addr %s268, 8
        %s270 = scalar_lea.vmem [#allocation8], %s269
        // Predicated region
        $region49: #{tpu_custom_call.1} parent=35 // pred_check
          %p271 = pneg %p128
        $region50: #{tpu_custom_call.1} parent=35 // pred_check_branch
          %273 = sbr.rel (%p271) target = $region52
        $region51: #{tpu_custom_call.1} parent=35 // pred_region
          %274 = dma.done %s267, 128
        $region52: #{tpu_custom_call.1} parent=35 // pred_fallthru
          _
        %s275 = sand.u32 %s47, 1
        %s276 = scalar_lea.sflag [#allocation3], %s275
        %s277 = sand.u32 %s47, 1
        %s278 = smul.addr %s277, 8
        %s279 = scalar_lea.vmem [#allocation2], %s278
        %p280 = pneg %p60
        %p281 = pneg %p57
        %p282 = pneg %p81
        %p283 = pneg %p78
        %p284 = pneg %p102
        %p285 = pneg %p99
        %s286 = sand.u32 %s115, 1
        %s287 = scalar_lea.sflag [#allocation9], %s286
        %s288 = sand.u32 %s115, 1
        %s289 = smul.addr %s288, 8
        %s290 = scalar_lea.vmem [#allocation8], %s289
        %p291 = pneg %p128
        %p292 = pneg %p125
        %p293 = pneg %p156
        %p294 = pneg %p153
        %s295 = sand.u32 %s143, 1
        %s296 = scalar_lea.sflag [#allocation4], %s295
        %s297 = sand.u32 %s143, 1
        %s298 = smul.addr %s297, 16
        %s299 = scalar_lea.vmem [#allocation10], %s298
        %s300 = smul.u32 2, %s30
        %s301 = smul.u32 2, %s30
        %v303 = vld [vmem:[%s253] sm:$0xf]
        %v304 = vld [vmem:[%s253 + $0x4] sm:$0xf]
        %v305 = vld [vmem:[#allocation5] sm:$0xff]
        %v306 = vld [vmem:[#allocation5 + $0x8] sm:$0xff]
        %v307 = vld [vmem:[#allocation5 + $0x10] sm:$0xff]
        %v308 = vld [vmem:[#allocation5 + $0x18] sm:$0xff]
        %v309 = vld [vmem:[#allocation5 + $0x20] sm:$0xff]
        %v310 = vld [vmem:[#allocation5 + $0x28] sm:$0xff]
        %v311 = vld [vmem:[#allocation5 + $0x30] sm:$0xff]
        %v312 = vld [vmem:[#allocation5 + $0x38] sm:$0xff]
        %v315 = vunpack.c.l.b16 %v303
        %v316 = vunpack.c.l.b16 %v304
        %v317 = vpack.c.b16 %v316, %v315
        %v326 = vunpack.c.l.b16 %v305
        %v327 = vunpack.c.h.b16 %v305
        %v328 = vunpack.c.l.b16 %v306
        %v329 = vunpack.c.h.b16 %v306
        %v330 = vunpack.c.l.b16 %v307
        %v331 = vunpack.c.h.b16 %v307
        %v332 = vunpack.c.l.b16 %v308
        %v333 = vunpack.c.h.b16 %v308
        %v334 = vunpack.c.l.b16 %v309
        %v335 = vunpack.c.h.b16 %v309
        %v336 = vunpack.c.l.b16 %v310
        %v337 = vunpack.c.h.b16 %v310
        %v338 = vunpack.c.l.b16 %v311
        %v339 = vunpack.c.h.b16 %v311
        %v340 = vunpack.c.l.b16 %v312
        %v341 = vunpack.c.h.b16 %v312
        %v342 = vpack.c.b16 %v328, %v326
        %v343 = vpack.c.b16 %v329, %v327
        %v344 = vpack.c.b16 %v332, %v330
        %v345 = vpack.c.b16 %v333, %v331
        %v346 = vpack.c.b16 %v336, %v334
        %v347 = vpack.c.b16 %v337, %v335
        %v348 = vpack.c.b16 %v340, %v338
        %v349 = vpack.c.b16 %v341, %v339
        %vm358 = vcmask 523264
        %v360 = vsel %vm358, %v317, 0
        %362 = vmatprep.subr.bf16.mxu0 %v343
        %363 = vmatpush1.bf16.msra.mxu0 %v342
        %364 = vmatprep.subr.bf16.mxu0 %v345
        %365 = vmatpush1.bf16.msra.mxu0 %v344
        %366 = vmatprep.subr.bf16.mxu0 %v347
        %367 = vmatpush1.bf16.msra.mxu0 %v346
        %368 = vmatprep.subr.bf16.mxu0 %v349
        %369 = vmatpush1.bf16.msra.mxu0 %v348
        %370 = vmatprep.subr.bf16.mxu0 0
        %371 = vmatpush1.bf16.msra.mxu0 0
        %372 = vmatprep.subr.bf16.mxu0 0
        %373 = vmatpush1.bf16.msra.mxu0 0
        %374 = vmatprep.subr.bf16.mxu0 0
        %375 = vmatpush1.bf16.msra.mxu0 0
        %376 = vmatprep.subr.bf16.mxu0 0
        %377 = vmatpush1.bf16.msra.mxu0 0
        %378 = vmatprep.subr.bf16.mxu0 0
        %379 = vmatpush1.bf16.msra.mxu0 0
        %380 = vmatprep.subr.bf16.mxu0 0
        %381 = vmatpush1.bf16.msra.mxu0 0
        %382 = vmatprep.subr.bf16.mxu0 0
        %383 = vmatpush1.bf16.msra.mxu0 0
        %384 = vmatprep.subr.bf16.mxu0 0
        %385 = vmatpush1.bf16.msra.mxu0 0
        %386 = vmatprep.subr.bf16.mxu0 0
        %387 = vmatpush1.bf16.msra.mxu0 0
        %388 = vmatprep.subr.bf16.mxu0 0
        %389 = vmatpush1.bf16.msra.mxu0 0
        %390 = vmatprep.subr.bf16.mxu0 0
        %391 = vmatpush1.bf16.msra.mxu0 0
        %392 = vmatprep.subr.bf16.mxu0 0
        %393 = vmatpush1.bf16.msra.mxu0 0
        %394 = vmatprep.mubr.bf16.mxu0 0
        %395 = vmatmul.mubr.bf16.gmra.mrb[0].mxu0 %v360
        %v396 = vpop.f32.mrb[0].mxu0
        %v397 = vadd.f32 0.0, %v396
        %v398 = vpop.f32.mrb[0].mxu0
        %v399 = vadd.f32 0.0, %v398
        %v400 = vpop.f32.mrb[0].mxu0
        %v401 = vadd.f32 0.0, %v400
        %v402 = vpop.f32.mrb[0].mxu0
        %v403 = vadd.f32 0.0, %v402
        %404 = vdwg.mxu0
        %v405 = vmul.f32 %v397, %v397
        %v406 = vmul.f32 %v401, %v401
        %v407 = vmul.f32 %v399, %v399
        %v408 = vmul.f32 %v403, %v403
        %v409 = vadd.f32 %v405, %v407
        %v410 = vadd.f32 %v406, %v408
        %v411 = vpack.c.bf16 %v410, %v409
        %v412 = vld [vmem:[#allocation7] sm:$0xf]
        %v413 = vld [vmem:[#allocation7 + $0x4] sm:$0xf]
        %v414 = vld [vmem:[#allocation7 + $0x8] sm:$0xf]
        %v415 = vld [vmem:[#allocation7 + $0xc] sm:$0xf]
        %v416 = vld [vmem:[#allocation7 + $0x10] sm:$0xf]
        %v417 = vld [vmem:[#allocation7 + $0x14] sm:$0xf]
        %v418 = vld [vmem:[#allocation7 + $0x18] sm:$0xf]
        %v419 = vld [vmem:[#allocation7 + $0x1c] sm:$0xf]
        %v420 = vld [vmem:[#allocation7 + $0x20] sm:$0xf]
        %v421 = vld [vmem:[#allocation7 + $0x24] sm:$0xf]
        %v422 = vld [vmem:[#allocation7 + $0x28] sm:$0xf]
        %v423 = vld [vmem:[#allocation7 + $0x2c] sm:$0xf]
        %v424 = vld [vmem:[#allocation7 + $0x30] sm:$0xf]
        %v425 = vld [vmem:[#allocation7 + $0x34] sm:$0xf]
        %v426 = vld [vmem:[#allocation7 + $0x38] sm:$0xf]
        %v427 = vld [vmem:[#allocation7 + $0x3c] sm:$0xf]
        %v444 = vunpack.c.l.b16 %v412
        %v445 = vunpack.c.l.b16 %v413
        %v446 = vunpack.c.l.b16 %v414
        %v447 = vunpack.c.l.b16 %v415
        %v448 = vunpack.c.l.b16 %v416
        %v449 = vunpack.c.l.b16 %v417
        %v450 = vunpack.c.l.b16 %v418
        %v451 = vunpack.c.l.b16 %v419
        %v452 = vunpack.c.l.b16 %v420
        %v453 = vunpack.c.l.b16 %v421
        %v454 = vunpack.c.l.b16 %v422
        %v455 = vunpack.c.l.b16 %v423
        %v456 = vunpack.c.l.b16 %v424
        %v457 = vunpack.c.l.b16 %v425
        %v458 = vunpack.c.l.b16 %v426
        %v459 = vunpack.c.l.b16 %v427
        %v460 = vpack.c.b16 %v445, %v444
        %v461 = vpack.c.b16 %v447, %v446
        %v462 = vpack.c.b16 %v449, %v448
        %v463 = vpack.c.b16 %v451, %v450
        %v464 = vpack.c.b16 %v453, %v452
        %v465 = vpack.c.b16 %v455, %v454
        %v466 = vpack.c.b16 %v457, %v456
        %v467 = vpack.c.b16 %v459, %v458
        %476 = vmatprep.subr.bf16.mxu0 0
        %477 = vmatpush1.bf16.msra.mxu0 %v460
        %478 = vmatprep.subr.bf16.mxu0 0
        %479 = vmatpush1.bf16.msra.mxu0 %v461
        %480 = vmatprep.subr.bf16.mxu0 0
        %481 = vmatpush1.bf16.msra.mxu0 %v462
        %482 = vmatprep.subr.bf16.mxu0 0
        %483 = vmatpush1.bf16.msra.mxu0 %v463
        %484 = vmatprep.subr.bf16.mxu0 0
        %485 = vmatpush1.bf16.msra.mxu0 %v464
        %486 = vmatprep.subr.bf16.mxu0 0
        %487 = vmatpush1.bf16.msra.mxu0 %v465
        %488 = vmatprep.subr.bf16.mxu0 0
        %489 = vmatpush1.bf16.msra.mxu0 %v466
        %490 = vmatprep.subr.bf16.mxu0 0
        %491 = vmatpush1.bf16.msra.mxu0 %v467
        %492 = vmatprep.subr.bf16.mxu0 0
        %493 = vmatpush1.bf16.msra.mxu0 0
        %494 = vmatprep.subr.bf16.mxu0 0
        %495 = vmatpush1.bf16.msra.mxu0 0
        %496 = vmatprep.subr.bf16.mxu0 0
        %497 = vmatpush1.bf16.msra.mxu0 0
        %498 = vmatprep.subr.bf16.mxu0 0
        %499 = vmatpush1.bf16.msra.mxu0 0
        %500 = vmatprep.subr.bf16.mxu0 0
        %501 = vmatpush1.bf16.msra.mxu0 0
        %502 = vmatprep.subr.bf16.mxu0 0
        %503 = vmatpush1.bf16.msra.mxu0 0
        %504 = vmatprep.subr.bf16.mxu0 0
        %505 = vmatpush1.bf16.msra.mxu0 0
        %506 = vmatprep.subr.bf16.mxu0 0
        %507 = vmatpush1.bf16.msra.mxu0 0
        %508 = vmatprep.mubr.bf16.mxu0 0
        %509 = vmatmul.mubr.bf16.gmra.mrb[0].mxu0 %v411
        %v510 = vpop.f32.mrb[0].mxu0
        %v511 = vadd.f32 0.0, %v510
        %v512 = vpop.f32.mrb[0].mxu0
        %v513 = vpop.f32.mrb[0].mxu0
        %v514 = vadd.f32 0.0, %v513
        %v515 = vpop.f32.mrb[0].mxu0
        %516 = vdwg.mxu0
        %v517 = vmax.f32 %v511, 1e-06
        %v518 = vmax.f32 %v514, 1e-06
        %v519 = vlog2.pop %v517
        %v520 = vmul.f32 %v519, 0.6931472
        %v521 = vlog2.pop %v518
        %v522 = vmul.f32 %v521, 0.6931472
        %v523 = vld [vmem:[%s270] sm:$0xff]
        %v524 = vlaneseq
        %v525 = vshrl.u32 %v524, 7
        %v526 = vsub.s32 0, %v525
        %v527 = vrot.slane %v523, %v526
        %v528 = vmul.f32 %v520, %v527
        %v529 = vmul.f32 %v522, %v527
        %530 = vst [vmem:[%s299] sm:$0xff] %v528
        %531 = vst [vmem:[%s299 + $0x8] sm:$0xff] %v529
        %s532 = sand.u32 %s143, 1
        %s533 = scalar_lea.sflag [#allocation4], %s532
        %s534 = sand.u32 %s143, 1
        %s535 = smul.addr %s534, 16
        %s536 = scalar_lea.vmem [#allocation10], %s535
        // Predicated region
        $region53: #{tpu_custom_call.1} parent=35 // pred_check
          %p537 = pneg %p153
        $region54: #{tpu_custom_call.1} parent=35 // pred_check_branch
          %539 = sbr.rel (%p537) target = $region56
        $region55: #{tpu_custom_call.1} parent=35 // pred_region
          %s540 = smul.u32 2, %s30
          %s542 = ssub.s32 256, 256
          %543 = vsyncadd %s533, %s542
          %s544 = smul.addr %s29, 2
          %s545 = sadd.s32 %s540, %s544
          %s546 = smul.addr %s545, 128
          %s547 = scalar_lea.hbm %s4, %s546
          %s548 = sshll.u32 %s536, 4
          %s549 = int_to_ptr.vmem [resolvable:$true] %s548
          %554 = dma.vmem_to_hbm [thread:$0]  %s549, 256, %s547, %s533, 128, 128, 8
        $region56: #{tpu_custom_call.1} parent=35 // pred_fallthru
          _
      $region36: #{tpu_custom_call.1} parent=5 // pred_fallthru
        _
      %p555 = scmp.le.s32.totalorder 2, %s20
      // Predicated region
      $region57: #{tpu_custom_call.1} parent=5 // pred_check
        %p556 = pneg %p555
      $region58: #{tpu_custom_call.1} parent=5 // pred_check_branch
        %558 = sbr.rel (%p556) target = $region60
      $region59: #{tpu_custom_call.1} parent=5 // pred_region
        %s559 = ssub.s32 %s20, 2
        // Predicated region
        $region61: #{tpu_custom_call.1} parent=59 // pred_check
          %p560 = pneg %p159
        $region62: #{tpu_custom_call.1} parent=59 // pred_check_branch
          %562 = sbr.rel (%p560) target = $region64
        $region63: #{tpu_custom_call.1} parent=59 // pred_region
          %s563 = sand.u32 %s144, 1
          %s564 = scalar_lea.sflag [#allocation4], %s563
          %s565 = sand.u32 %s144, 1
          %s566 = smul.addr %s565, 16
          %s567 = scalar_lea.vmem [#allocation10], %s566
          %568 = dma.done %s564, 256
        $region64: #{tpu_custom_call.1} parent=59 // pred_fallthru
          _
      $region60: #{tpu_custom_call.1} parent=5 // pred_fallthru
        _
    $region6: #{tpu_custom_call.1} parent=1 // loop_footer
      %s24 = sadd.s32 1, %s20
    $region7: #{tpu_custom_call.1} parent=1 // loop_footer_branch
      %19 = sbr.rel target = $region3
    $region8: #{tpu_custom_call.1} parent=1 // loop_exit
      _
    %569 = vsyncpa [#allocation3], 1
    %s570 = scalar_lea.sflag [#allocation3], 1
    %571 = vsyncpa %s570, 1
    %572 = vsyncpa [#allocation6], 1
    %573 = vsyncpa [#allocation9], 1
    %s574 = scalar_lea.sflag [#allocation9], 1
    %575 = vsyncpa %s574, 1
    %576 = vsyncpa [#allocation4], 1
    %s577 = scalar_lea.sflag [#allocation4], 1
    %578 = vsyncpa %s577, 1

</llo_original>
